<compile_context>
chip_gen: v7x
topology: tpu7x:2x2x1
jax: 0.10.0
libtpu: 0.0.40
codegen_flags: <defaults>
</compile_context>

<pallas_src>
import jax
import jax.numpy as jnp
from jax.experimental import pallas as pl
from jax.experimental.pallas import tpu as pltpu

NUM_FEATURES = 4
DEGREE = 5                 # must be >= 2 for the unrolled Clenshaw below
KAN_SPLINE_ORDER = 3       # polynomial "spline" order inside the KAN layer
_EPS = 1e-6

_LANE = 128
_MAX_TB = 32768            # lanes per grid step; (8, 32768) f32 block = 1 MiB

_PARAM_COLS = 16
_BASE_COL = DEGREE + KAN_SPLINE_ORDER          # column 8: 0.5 * kan_base
_BIAS_COL = _BASE_COL + 1                      # column 9: bias (replicated)


def _round_up(n, m):
    return ((n + m - 1) // m) * m


def _quantum_kan_kernel(x_ref, param_ref, out_ref):
    x = x_ref[...]                                         # (8, TB): rows 0-3 = feats of batch half 0,
    params = param_ref[...]                                #           rows 4-7 = feats of batch half 1
    coeff = params[:, 0:DEGREE]                            # (8, D) fused LCU*sum coeffs (tiled 2x)
    poly_w = params[:, DEGREE:DEGREE + KAN_SPLINE_ORDER]   # (8, K) spline coeffs (const term has +0.5*base folded)
    base_w = params[:, _BASE_COL:_BASE_COL + 1]            # (8, 1) = 0.5 * kan_base
    bias2 = params[0:2, _BIAS_COL:_BIAS_COL + 1]           # (2, 1)

    # ---- QSVT surrogate: Chebyshev series of tanh(x), per-feature coefficients. ----
    xc = jnp.tanh(x)                                       # (8, TB), EUP
    x2 = 2.0 * xc

    # Clenshaw recurrence for  S = sum_{d=1..D} c_d * T_d(xc)  (c_0 = 0):
    #   b_{D+1}=b_{D+2}=0;  b_k = c_k + 2x*b_{k+1} - b_{k+2};  S = x*b_1 - b_2.
    b_kp1 = coeff[:, DEGREE - 1:DEGREE]                    # b_D = c_D            (8, 1)
    b_k = coeff[:, DEGREE - 2:DEGREE - 1] + x2 * b_kp1     # b_{D-1}              (8, TB)
    b_kp2, b_kp1 = b_kp1, b_k
    for k in range(DEGREE - 2, 0, -1):                     # static unroll, k = D-2 .. 1
        b_k = coeff[:, k - 1:k] + x2 * b_kp1 - b_kp2
        b_kp2, b_kp1 = b_kp1, b_k
    feat = xc * b_kp1 - b_kp2                              # (8, TB)

    # ---- KAN layer (F -> 1): silu base branch (tanh-form sigmoid, folded in wrapper)
    #      + Horner'd polynomial spline branch. ----
    t = jnp.tanh(0.5 * feat)                               # (8, TB), EUP

    poly = poly_w[:, KAN_SPLINE_ORDER - 1:KAN_SPLINE_ORDER]     # p_{K-1}          (8, 1)
    for k in range(KAN_SPLINE_ORDER - 2, -1, -1):                # Horner
        poly = poly_w[:, k:k + 1] + feat * poly                  # (8, TB)

    acc = feat * (base_w * t + poly)                       # (8, TB)

    # Per-half feature reduction: sublane-row adds -> lane-dense (2, TB) output.
    g0 = (acc[0:1, :] + acc[1:2, :]) + (acc[2:3, :] + acc[3:4, :])
    g1 = (acc[4:5, :] + acc[5:6, :]) + (acc[6:7, :] + acc[7:8, :])
    out_ref[...] = jnp.concatenate([g0, g1], axis=0) + bias2


@jax.jit
def quantum_kan_regressor(x, lcu_w, sum_w, kan_base, kan_poly, kan_bias):
    """x: (B, F); lcu_w/sum_w: (F, D); kan_base: (F,); kan_poly: (F, K); kan_bias: (1,1)."""
    B, F = x.shape
    assert F == NUM_FEATURES

    # Parameter-only preprocessing hoisted out of the kernel:
    #  * LCU normalization fused with the QuantumSumBlock weights:
    #      coeff[f, d] = lcu[f, d] * sum[f, d] / sum_d |lcu[f, :]|
    #  * tanh-form sigmoid fold: base*silu(z) = (0.5*base)*z*tanh(z/2) + (0.5*base)*z,
    #    so base_eff = 0.5*base and the linear term is folded into the spline constant.
    lcu_norm = jnp.sum(jnp.abs(lcu_w), axis=1, keepdims=True) + _EPS          # (F, 1)
    coeff = (lcu_w * sum_w / lcu_norm).astype(jnp.float32)                    # (F, D)
    base_eff = 0.5 * kan_base.astype(jnp.float32)                             # (F,)
    poly_eff = kan_poly.astype(jnp.float32).at[:, 0].add(base_eff)            # (F, K)
    bias = jnp.reshape(kan_bias, ()).astype(jnp.float32)

    params = jnp.zeros((8, _PARAM_COLS), jnp.float32)
    params = params.at[:, 0:DEGREE].set(jnp.tile(coeff, (2, 1)))
    params = params.at[:, DEGREE:DEGREE + KAN_SPLINE_ORDER].set(jnp.tile(poly_eff, (2, 1)))
    params = params.at[:, _BASE_COL].set(jnp.tile(base_eff, 2))
    params = params.at[:, _BIAS_COL].set(bias)

    # 2x sublane-packed, feature-major, lane-dense layout: batch on the 128-lane axis,
    # split in two halves stacked along sublanes (full 8-sublane vreg occupancy).
    b_half = (B + 1) // 2
    lanes = _round_up(b_half, _LANE)
    if lanes >= 2 * _LANE:
        # Cap the tile so the grid has >= 2 steps (shards across v7x's 2 TensorCores).
        tb = min(_MAX_TB, _round_up((lanes + 1) // 2, _LANE))
    else:
        tb = lanes
    lanes_pad = _round_up(lanes, tb)
    b_pad = 2 * lanes_pad

    x_t = jnp.pad(x.T.astype(jnp.float32), ((0, 0), (0, b_pad - B)))          # (F, b_pad)
    xt = jnp.concatenate([x_t[:, :lanes_pad], x_t[:, lanes_pad:]], axis=0)    # (8, lanes_pad)

    out = pl.pallas_call(
        _quantum_kan_kernel,
        out_shape=jax.ShapeDtypeStruct((2, lanes_pad), jnp.float32),
        grid_spec=pltpu.PrefetchScalarGridSpec(
            num_scalar_prefetch=0,
            grid=(lanes_pad // tb,),
            in_specs=[
                pl.BlockSpec((8, tb), lambda i: (0, i)),                 # packed x tile
                pl.BlockSpec((8, _PARAM_COLS), lambda i: (0, 0)),        # consolidated params
            ],
            out_specs=pl.BlockSpec((2, tb), lambda i: (0, i)),
        ),
        compiler_params=pltpu.CompilerParams(
            dimension_semantics=("parallel",),          # megacore split on v7x
            vmem_limit_bytes=32 * 1024 * 1024,          # blocks + temporaries ~10 MiB max
        ),
        cost_estimate=pl.CostEstimate(
            flops=25 * 8 * lanes_pad,
            transcendentals=2 * 8 * lanes_pad,          # two tanh per element-feature
            bytes_accessed=4 * 8 * lanes_pad + 4 * 2 * lanes_pad + 4 * 8 * _PARAM_COLS,
        ),
    )(xt, params)

    # Row 0 covers batch [0, lanes_pad), row 1 covers [lanes_pad, 2*lanes_pad).
    return out.reshape(-1)[:B].reshape(B, 1)


def _reference(x, lcu_w, sum_w, kan_base, kan_poly, kan_bias):
    """Pure-JAX reference of the same math (batch-major), for correctness checking."""
    xc = jnp.tanh(x)                                                     # (B, F)
    coeff = lcu_w * sum_w / (jnp.sum(jnp.abs(lcu_w), axis=1, keepdims=True) + _EPS)  # (F, D)
    t_prev, t_cur = jnp.ones_like(xc), xc
    feat = coeff[:, 0][None, :] * t_cur
    for d in range(1, DEGREE):
        t_next = 2.0 * xc * t_cur - t_prev
        feat = feat + coeff[:, d][None, :] * t_next
        t_prev, t_cur = t_cur, t_next
    silu = feat * jax.nn.sigmoid(feat)
    acc = kan_base[None, :] * silu
    p = feat
    acc = acc + kan_poly[:, 0][None, :] * p
    for k in range(1, KAN_SPLINE_ORDER):
        p = p * feat
        acc = acc + kan_poly[:, k][None, :] * p
    return jnp.sum(acc, axis=1, keepdims=True) + jnp.reshape(kan_bias, (1, 1))


if __name__ == "__main__":
    key = jax.random.PRNGKey(0)
    k_x, k_lcu, k_sum, k_base, k_poly = jax.random.split(key, 5)

    B = 2
    x = jax.random.normal(k_x, (B, NUM_FEATURES), jnp.float32)

    # Parameter shapes mirror the module's __init__: lcu_weights ~ torch.rand(F, D),
    # one QuantumSumBlock(D) weight vector per feature, KANLayer(F -> 1).
    lcu_w = jax.random.uniform(k_lcu, (NUM_FEATURES, DEGREE), jnp.float32)
    sum_w = jax.random.uniform(k_sum, (NUM_FEATURES, DEGREE), jnp.float32)
    kan_base = 0.5 * jax.random.normal(k_base, (NUM_FEATURES,), jnp.float32)
    kan_poly = 0.1 * jax.random.normal(k_poly, (NUM_FEATURES, KAN_SPLINE_ORDER), jnp.float32)
    kan_bias = jnp.zeros((1, 1), jnp.float32)

    y = quantum_kan_regressor(x, lcu_w, sum_w, kan_base, kan_poly, kan_bias)
    y = jax.block_until_ready(y)

    y_ref = _reference(x, lcu_w, sum_w, kan_base, kan_poly, kan_bias)
    assert y.shape == (B, 1), y.shape
    # Exact-math sigmoid (tanh form) + Clenshaw reordering: tight tolerance.
    assert jnp.allclose(y, y_ref, atol=1e-3, rtol=1e-3), (y, y_ref)

    print("KERNEL_OK")
</pallas_src>

<mosaic_0001>
module attributes {stable_mosaic.version = 11 : i64} {
  func.func @_quantum_kan_kernel(%arg0: i32, %arg1: memref<8x128xf32, #tpu.memory_space<vmem>>, %arg2: memref<8x16xf32, #tpu.memory_space<vmem>>, %arg3: memref<2x128xf32, #tpu.memory_space<vmem>>) attributes {dimension_semantics = [#tpu.dimension_semantics<parallel>], iteration_bounds = array<i64: 1>, scalar_prefetch = 0 : i64, scratch_operands = 0 : i64, tpu.core_type = #tpu.core_type<tc>, window_params = [{transform_indices = @transform_0, window_bounds = array<i64: 8, 128>}, {pipeline_mode = #tpu.pipeline_mode<synchronous>, transform_indices = @transform_1, window_bounds = array<i64: 8, 16>}, {transform_indices = @transform_2, window_bounds = array<i64: 2, 128>}]} {
    %c0 = arith.constant 0 : index
    %c0_0 = arith.constant 0 : index
    %0 = vector.load %arg1[%c0, %c0_0] : memref<8x128xf32, #tpu.memory_space<vmem>>, vector<8x128xf32>
    %c0_1 = arith.constant 0 : index
    %c0_2 = arith.constant 0 : index
    %1 = vector.load %arg2[%c0_1, %c0_2] : memref<8x16xf32, #tpu.memory_space<vmem>>, vector<8x16xf32>
    %2 = vector.extract_strided_slice %1 {offsets = [0, 0], sizes = [8, 5], strides = [1, 1]} : vector<8x16xf32> to vector<8x5xf32>
    %3 = vector.extract_strided_slice %1 {offsets = [0, 5], sizes = [8, 3], strides = [1, 1]} : vector<8x16xf32> to vector<8x3xf32>
    %4 = vector.extract_strided_slice %1 {offsets = [0, 8], sizes = [8, 1], strides = [1, 1]} : vector<8x16xf32> to vector<8x1xf32>
    %5 = vector.extract_strided_slice %1 {offsets = [0, 9], sizes = [2, 1], strides = [1, 1]} : vector<8x16xf32> to vector<2x1xf32>
    %6 = math.tanh %0 : vector<8x128xf32>
    %cst = arith.constant 2.000000e+00 : f32
    %7 = vector.broadcast %cst : f32 to vector<8x128xf32>
    %8 = arith.mulf %7, %6 : vector<8x128xf32>
    %9 = vector.extract_strided_slice %2 {offsets = [0, 4], sizes = [8, 1], strides = [1, 1]} : vector<8x5xf32> to vector<8x1xf32>
    %10 = vector.extract_strided_slice %2 {offsets = [0, 3], sizes = [8, 1], strides = [1, 1]} : vector<8x5xf32> to vector<8x1xf32>
    %11 = vector.broadcast %9 : vector<8x1xf32> to vector<8x128xf32>
    %12 = arith.mulf %8, %11 : vector<8x128xf32>
    %13 = vector.broadcast %10 : vector<8x1xf32> to vector<8x128xf32>
    %14 = arith.addf %13, %12 : vector<8x128xf32>
    %15 = vector.extract_strided_slice %2 {offsets = [0, 2], sizes = [8, 1], strides = [1, 1]} : vector<8x5xf32> to vector<8x1xf32>
    %16 = arith.mulf %8, %14 : vector<8x128xf32>
    %17 = vector.broadcast %15 : vector<8x1xf32> to vector<8x128xf32>
    %18 = arith.addf %17, %16 : vector<8x128xf32>
    %19 = vector.broadcast %9 : vector<8x1xf32> to vector<8x128xf32>
    %20 = arith.subf %18, %19 : vector<8x128xf32>
    %21 = vector.extract_strided_slice %2 {offsets = [0, 1], sizes = [8, 1], strides = [1, 1]} : vector<8x5xf32> to vector<8x1xf32>
    %22 = arith.mulf %8, %20 : vector<8x128xf32>
    %23 = vector.broadcast %21 : vector<8x1xf32> to vector<8x128xf32>
    %24 = arith.addf %23, %22 : vector<8x128xf32>
    %25 = arith.subf %24, %14 : vector<8x128xf32>
    %26 = vector.extract_strided_slice %2 {offsets = [0, 0], sizes = [8, 1], strides = [1, 1]} : vector<8x5xf32> to vector<8x1xf32>
    %27 = arith.mulf %8, %25 : vector<8x128xf32>
    %28 = vector.broadcast %26 : vector<8x1xf32> to vector<8x128xf32>
    %29 = arith.addf %28, %27 : vector<8x128xf32>
    %30 = arith.subf %29, %20 : vector<8x128xf32>
    %31 = arith.mulf %6, %30 : vector<8x128xf32>
    %32 = arith.subf %31, %25 : vector<8x128xf32>
    %cst_3 = arith.constant 5.000000e-01 : f32
    %33 = vector.broadcast %cst_3 : f32 to vector<8x128xf32>
    %34 = arith.mulf %33, %32 : vector<8x128xf32>
    %35 = math.tanh %34 : vector<8x128xf32>
    %36 = vector.extract_strided_slice %3 {offsets = [0, 2], sizes = [8, 1], strides = [1, 1]} : vector<8x3xf32> to vector<8x1xf32>
    %37 = vector.extract_strided_slice %3 {offsets = [0, 1], sizes = [8, 1], strides = [1, 1]} : vector<8x3xf32> to vector<8x1xf32>
    %38 = vector.broadcast %36 : vector<8x1xf32> to vector<8x128xf32>
    %39 = arith.mulf %32, %38 : vector<8x128xf32>
    %40 = vector.broadcast %37 : vector<8x1xf32> to vector<8x128xf32>
    %41 = arith.addf %40, %39 : vector<8x128xf32>
    %42 = vector.extract_strided_slice %3 {offsets = [0, 0], sizes = [8, 1], strides = [1, 1]} : vector<8x3xf32> to vector<8x1xf32>
    %43 = arith.mulf %32, %41 : vector<8x128xf32>
    %44 = vector.broadcast %42 : vector<8x1xf32> to vector<8x128xf32>
    %45 = arith.addf %44, %43 : vector<8x128xf32>
    %46 = vector.broadcast %4 : vector<8x1xf32> to vector<8x128xf32>
    %47 = arith.mulf %46, %35 : vector<8x128xf32>
    %48 = arith.addf %47, %45 : vector<8x128xf32>
    %49 = arith.mulf %32, %48 : vector<8x128xf32>
    %50 = vector.extract_strided_slice %49 {offsets = [0, 0], sizes = [1, 128], strides = [1, 1]} : vector<8x128xf32> to vector<1x128xf32>
    %51 = vector.extract_strided_slice %49 {offsets = [1, 0], sizes = [1, 128], strides = [1, 1]} : vector<8x128xf32> to vector<1x128xf32>
    %52 = arith.addf %50, %51 : vector<1x128xf32>
    %53 = vector.extract_strided_slice %49 {offsets = [2, 0], sizes = [1, 128], strides = [1, 1]} : vector<8x128xf32> to vector<1x128xf32>
    %54 = vector.extract_strided_slice %49 {offsets = [3, 0], sizes = [1, 128], strides = [1, 1]} : vector<8x128xf32> to vector<1x128xf32>
    %55 = arith.addf %53, %54 : vector<1x128xf32>
    %56 = arith.addf %52, %55 : vector<1x128xf32>
    %57 = vector.extract_strided_slice %49 {offsets = [4, 0], sizes = [1, 128], strides = [1, 1]} : vector<8x128xf32> to vector<1x128xf32>
    %58 = vector.extract_strided_slice %49 {offsets = [5, 0], sizes = [1, 128], strides = [1, 1]} : vector<8x128xf32> to vector<1x128xf32>
    %59 = arith.addf %57, %58 : vector<1x128xf32>
    %60 = vector.extract_strided_slice %49 {offsets = [6, 0], sizes = [1, 128], strides = [1, 1]} : vector<8x128xf32> to vector<1x128xf32>
    %61 = vector.extract_strided_slice %49 {offsets = [7, 0], sizes = [1, 128], strides = [1, 1]} : vector<8x128xf32> to vector<1x128xf32>
    %62 = arith.addf %60, %61 : vector<1x128xf32>
    %63 = arith.addf %59, %62 : vector<1x128xf32>
    %64 = tpu.concatenate %56, %63 in 0 : vector<1x128xf32>, vector<1x128xf32> -> vector<2x128xf32>
    %65 = vector.broadcast %5 : vector<2x1xf32> to vector<2x128xf32>
    %66 = arith.addf %64, %65 : vector<2x128xf32>
    %c0_4 = arith.constant 0 : index
    %c0_5 = arith.constant 0 : index
    %67 = vector.load %arg3[%c0_4, %c0_5] : memref<2x128xf32, #tpu.memory_space<vmem>>, vector<2x128xf32>
    tpu.vector_store %arg3[%c0_4, %c0_5], %66 {strides = array<i32>} : memref<2x128xf32, #tpu.memory_space<vmem>>, vector<2x128xf32>,
    return
  }
  func.func @transform_0(%arg0: i32) -> (i32, i32) {
    %c0_i32 = arith.constant 0 : i32
    %c0_i32_0 = arith.constant 0 : i32
    return %c0_i32, %arg0 : i32, i32
  }
  func.func @transform_1(%arg0: i32) -> (i32, i32) {
    %c0_i32 = arith.constant 0 : i32
    %c0_i32_0 = arith.constant 0 : i32
    %c0_i32_1 = arith.constant 0 : i32
    return %c0_i32, %c0_i32_0 : i32, i32
  }
  func.func @transform_2(%arg0: i32) -> (i32, i32) {
    %c0_i32 = arith.constant 0 : i32
    %c0_i32_0 = arith.constant 0 : i32
    return %c0_i32, %arg0 : i32, i32
  }
}

</mosaic_0001>

<llo_original>
// kernel: tile.28
$region0: #{tile.28}
  #allocation0 [shape = 's32[1]{0}', space=sflag, size = 0x4, scoped, tag = 'scoped memory for tile.28']
  %s0 = inlined_call_operand.vmem [shape: f32[4], index: 0, kind: input, shape index: {}]
  %s1 = inlined_call_operand.vmem [shape: f32[2,4], index: 1, kind: output, shape index: {}]
  // Predicated region
  $region2: #{tile.28} parent=0 // pred_check
    _
  $region3: #{tile.28} parent=0 // pred_check_branch
    %3 = sbr.rel (0) target = $region5
  $region4: #{tile.28} parent=0 // pred_region
    _
  $region5: #{tile.28} parent=0 // pred_fallthru
    _
  %v4 = vld [vmem:[%s0] ss:$0 sm:$0xff]
  %5 = vst [vmem:[%s1] sm:$0x3] %v4

// kernel: quantum_kan_regressor.1
$region0: #{quantum_kan_regressor.1}
  #allocation0 [shape = 'u32[]', space=smem, size = 0x4, offset = 0x4, fixed_abs, tag = 'smem constant byte address 0x4 - core index']
  #allocation1 [shape = 'u32[144,128]{1,0:T(1,128)}', space=vmem, size = 0x12000, scoped, tag = 'internal scratch']
  %s0 = inlined_call_operand.vmem [shape: f32[8,128], index: 0, kind: input, shape index: {}]
  %s1 = inlined_call_operand.vmem [shape: f32[8,16], index: 1, kind: input, shape index: {}]
  %s2 = inlined_call_operand.vmem [shape: f32[2,128], index: 2, kind: output, shape index: {}]
  %s3 = sld [smem:[#allocation0]]
  $region18: #{quantum_kan_regressor.1} parent=0
    _
  %s5 = ssub.s32 1, %s3
  %s6 = scalar_select 0, %s5, %s3
  // Predicated region
  $region2: #{quantum_kan_regressor.1} parent=0 // pred_check
    _
  $region3: #{quantum_kan_regressor.1} parent=0 // pred_check_branch
    %8 = sbr.rel (0) target = $region5
  $region4: #{quantum_kan_regressor.1} parent=0 // pred_region
    _
  $region5: #{quantum_kan_regressor.1} parent=0 // pred_fallthru
    _
  // Predicated region
  $region6: #{quantum_kan_regressor.1} parent=0 // pred_check
    _
  $region7: #{quantum_kan_regressor.1} parent=0 // pred_check_branch
    %10 = sbr.rel (0) target = $region9
  $region8: #{quantum_kan_regressor.1} parent=0 // pred_region
    _
  $region9: #{quantum_kan_regressor.1} parent=0 // pred_fallthru
    _
  %v11 = vld [vmem:[%s0] sm:$0xff]
  %v12 = vld [vmem:[%s1] sm:$0xff]
  %v13 = vtanh.pop %v11
  %v14 = vmul.f32 %v13, 2.0
  %16 = vset.pattern.permute.xlu0 4
  %17 = vperm.xlu0 %16, %v12
  %v18 = vpop.permute.xlu0 %17
  %v20 = vmul.f32 %v14, %v18
  %21 = vset.pattern.permute.xlu0 3
  %22 = vperm.xlu0 %21, %v12
  %v23 = vpop.permute.xlu0 %22
  %v25 = vadd.f32 %v23, %v20
  %v26 = vmul.f32 %v14, %v25
  %27 = vset.pattern.permute.xlu0 2
  %28 = vperm.xlu0 %27, %v12
  %v29 = vpop.permute.xlu0 %28
  %v31 = vadd.f32 %v29, %v26
  %v32 = vsub.f32 %v31, %v18
  %v33 = vmul.f32 %v14, %v32
  %34 = vset.pattern.permute.xlu0 1
  %35 = vperm.xlu0 %34, %v12
  %v36 = vpop.permute.xlu0 %35
  %v38 = vadd.f32 %v36, %v33
  %v39 = vsub.f32 %v38, %v25
  %v40 = vmul.f32 %v14, %v39
  %41 = vset.pattern.permute.xlu0 0
  %42 = vperm.xlu0 %41, %v12
  %v43 = vpop.permute.xlu0 %42
  %v45 = vadd.f32 %v43, %v40
  %v46 = vsub.f32 %v45, %v32
  %v47 = vmul.f32 %v13, %v46
  %v48 = vsub.f32 %v47, %v39
  %v49 = vmul.f32 %v48, 0.5
  %v50 = vtanh.pop %v49
  %51 = vset.pattern.permute.xlu0 7
  %52 = vperm.xlu0 %51, %v12
  %v53 = vpop.permute.xlu0 %52
  %v55 = vmul.f32 %v48, %v53
  %56 = vset.pattern.permute.xlu0 6
  %57 = vperm.xlu0 %56, %v12
  %v58 = vpop.permute.xlu0 %57
  %v60 = vadd.f32 %v58, %v55
  %v61 = vmul.f32 %v48, %v60
  %62 = vset.pattern.permute.xlu0 5
  %63 = vperm.xlu0 %62, %v12
  %v64 = vpop.permute.xlu0 %63
  %v66 = vadd.f32 %v64, %v61
  %67 = vset.pattern.permute.xlu0 8
  %68 = vperm.xlu0 %67, %v12
  %v69 = vpop.permute.xlu0 %68
  %v71 = vmul.f32 %v69, %v50
  %v72 = vadd.f32 %v71, %v66
  %v73 = vmul.f32 %v48, %v72
  %v75 = vrot.slane %v73, 1
  %v77 = vadd.f32 %v73, %v75
  %v79 = vrot.slane %v77, 2
  %v81 = vadd.f32 %v77, %v79
  %v83 = vrot.slane %v81, 3
  %vm85 = vcmask 1040384
  %v86 = vsel %vm85, %v81, %v83
  %87 = vset.pattern.permute.xlu0 9
  %88 = vperm.xlu0 %87, %v12
  %v89 = vpop.permute.xlu0 %88
  %v91 = vadd.f32 %v86, %v89
  %92 = vst [vmem:[%s2] sm:$0x3] %v91
  // Predicated region
  $region10: #{quantum_kan_regressor.1} parent=0 // pred_check
    _
  $region11: #{quantum_kan_regressor.1} parent=0 // pred_check_branch
    %94 = sbr.rel (0) target = $region13
  $region12: #{quantum_kan_regressor.1} parent=0 // pred_region
    _
  $region13: #{quantum_kan_regressor.1} parent=0 // pred_fallthru
    _
  // Predicated region
  $region14: #{quantum_kan_regressor.1} parent=0 // pred_check
    _
  $region15: #{quantum_kan_regressor.1} parent=0 // pred_check_branch
    %96 = sbr.rel (0) target = $region17
  $region16: #{quantum_kan_regressor.1} parent=0 // pred_region
    _
  $region17: #{quantum_kan_regressor.1} parent=0 // pred_fallthru
    _

</llo_original>
